<compile_context>
chip_gen: v5e
topology: v5e:2x2
jax: 0.10.0
libtpu: 0.0.40
codegen_flags: <defaults>
</compile_context>

<pallas_src>
import functools

import jax
import jax.numpy as jnp
import numpy as np
from jax.experimental import pallas as pl
from jax.experimental.pallas import tpu as pltpu

# ---------------- model constants (from the PyTorch module) ----------------
N_INPUTS = 28 * 28          # 784
N_HIDDEN1 = 100
N_HIDDEN2 = 10
DECAY = 0.9
THRESHOLD = 1.0
PENALTY_THRESHOLD = 1.5


def _spiking_kernel(rand_ref, x_ref, w1_ref, b1_ref, w2_ref, b2_ref,
                    out_ref, l1_seq_ref, *, n_time_steps, begin_eval):
    """Whole forward pass in one invocation (no grid).

    rand_ref   : (T, Bp, 784)   uniform [0,1) random activation per time step
    x_ref      : (Bp, 784)      flattened (batch-padded) input
    w1_ref     : (784, 100), b1_ref : (1, 100)
    w2_ref     : (100, 10),  b2_ref : (1, 10)
    out_ref    : (Bp, 10)       log-softmax output
    l1_seq_ref : (T*Bp, 100)    VMEM scratch: delayed layer-1 outputs per step
    """
    T = n_time_steps
    B = x_ref.shape[0]                      # padded batch (multiple of 8)
    penalty = PENALTY_THRESHOLD / THRESHOLD

    # ---- InputDataToSpikingPerceptronLayer, all T steps at once ----------
    # (T, Bp, 784) * (Bp, 784) -> (T*Bp, 784); Bp is a sublane multiple so the
    # reshape is tile-aligned (layout-trivial).
    xi = (rand_ref[...] * x_ref[...]).reshape(T * B, N_INPUTS)

    # ---- layer 1 excitation: one batched MXU call, bias folded once ------
    exc1 = jnp.dot(xi, w1_ref[...], preferred_element_type=jnp.float32)
    exc1 = exc1 + b1_ref[...]                                   # (T*B, 100)

    # ---- layer 1 recurrence (pure VPU, fully unrolled; T is small) -------
    # The value fed to layer 2 at step t is layer-1's *delayed* output
    # (prev_outer before the step-t update); stage it into VMEM scratch.
    zeros1 = jnp.zeros((B, N_HIDDEN1), jnp.float32)
    pi1, po1 = zeros1, zeros1
    for t in range(T):
        l1_seq_ref[t * B:(t + 1) * B, :] = po1       # delayed output
        if t < T - 1:                                # last update never read
            inner1 = exc1[t * B:(t + 1) * B, :] + pi1 * DECAY
            outer1 = jnp.maximum(inner1 - THRESHOLD, 0.0)
            gate1 = (outer1 > 0.0).astype(jnp.float32)
            pi1 = inner1 - penalty * inner1 * gate1
            po1 = outer1

    # ---- layer 2 excitation: one batched MXU call on the delayed sequence -
    exc2 = jnp.dot(l1_seq_ref[...], w2_ref[...],
                   preferred_element_type=jnp.float32)
    exc2 = exc2 + b2_ref[...]                                   # (T*B, 10)

    # ---- layer 2 recurrence (pure VPU). out[t] = delayed layer-2 state ----
    # (layer-2 prev_outer is never consumed downstream -> dropped entirely.)
    pi2 = jnp.zeros((B, N_HIDDEN2), jnp.float32)
    acc = jnp.zeros((B, N_HIDDEN2), jnp.float32)
    for t in range(T):
        if t >= begin_eval:                          # static python condition
            acc = acc + pi2                          # prev_inner before update
        if t < T - 1:                                # last update never read
            inner2 = exc2[t * B:(t + 1) * B, :] + pi2 * DECAY
            outer2 = jnp.maximum(inner2 - THRESHOLD, 0.0)
            gate2 = (outer2 > 0.0).astype(jnp.float32)
            pi2 = inner2 - penalty * inner2 * gate2

    # ---- mean over kept time steps, then log_softmax ----------------------
    mean = acc * (1.0 / float(T - begin_eval))
    mx = jnp.max(mean, axis=-1, keepdims=True)
    shifted = mean - mx
    lse = jnp.log(jnp.sum(jnp.exp(shifted), axis=-1, keepdims=True))
    out_ref[...] = shifted - lse


def spiking_net_forward(x_nchw, rand_tbi, w1, b1, w2, b2,
                        *, n_time_steps, begin_eval):
    """x_nchw: (B, C, H, W) with C*H*W == 784. rand_tbi: (T, B, 784)."""
    assert 0 <= begin_eval < n_time_steps          # avoids divide-by-zero mean
    B = x_nchw.shape[0]
    x_flat = x_nchw.reshape(B, -1).astype(jnp.float32)          # (B, 784)
    assert x_flat.shape[1] == N_INPUTS
    assert rand_tbi.shape == (n_time_steps, B, N_INPUTS)

    # Pad batch to a sublane multiple (8): sublane-full tiles, aligned slices,
    # no masked partial work. Padded rows are zero and sliced off below.
    Bp = ((B + 7) // 8) * 8
    pad = Bp - B
    x_pad = jnp.pad(x_flat, ((0, pad), (0, 0)))
    rand_pad = jnp.pad(rand_tbi.astype(jnp.float32),
                       ((0, 0), (0, pad), (0, 0)))

    kernel = functools.partial(_spiking_kernel,
                               n_time_steps=n_time_steps,
                               begin_eval=begin_eval)

    out_pad = pl.pallas_call(
        kernel,
        out_shape=jax.ShapeDtypeStruct((Bp, N_HIDDEN2), jnp.float32),
        # No grid: single invocation, every operand resident in VMEM.
        in_specs=[pl.BlockSpec(memory_space=pltpu.MemorySpace.VMEM)] * 6,
        out_specs=pl.BlockSpec(memory_space=pltpu.MemorySpace.VMEM),
        scratch_shapes=[
            pltpu.VMEM((n_time_steps * Bp, N_HIDDEN1), jnp.float32),
        ],
    )(rand_pad, x_pad, w1, b1, w2, b2)

    return out_pad[:B]


def _reference_forward(x_nchw, rand_tbi, w1, b1, w2, b2,
                       *, n_time_steps, begin_eval):
    """Pure-JAX reference of SpikingNet.forward (same precomputed randoms)."""
    B = x_nchw.shape[0]
    x = x_nchw.reshape(B, -1).astype(jnp.float32)
    pi1 = jnp.zeros((B, N_HIDDEN1), jnp.float32)
    po1 = jnp.zeros((B, N_HIDDEN1), jnp.float32)
    pi2 = jnp.zeros((B, N_HIDDEN2), jnp.float32)
    po2 = jnp.zeros((B, N_HIDDEN2), jnp.float32)
    outs = []
    for t in range(n_time_steps):
        xi = rand_tbi[t] * x
        exc1 = xi @ w1 + b1[0]
        inner1 = exc1 + pi1 * DECAY
        outer1 = jnp.maximum(inner1 - THRESHOLD, 0.0)
        gate1 = (outer1 > 0).astype(jnp.float32)
        inner1 = inner1 - (PENALTY_THRESHOLD / THRESHOLD) * inner1 * gate1
        l1_out = po1                                 # delayed layer-1 output
        pi1, po1 = inner1, outer1

        exc2 = l1_out @ w2 + b2[0]
        inner2 = exc2 + pi2 * DECAY
        outer2 = jnp.maximum(inner2 - THRESHOLD, 0.0)
        gate2 = (outer2 > 0).astype(jnp.float32)
        inner2 = inner2 - (PENALTY_THRESHOLD / THRESHOLD) * inner2 * gate2
        outs.append(pi2)                             # delayed layer-2 state
        pi2, po2 = inner2, outer2
    out = jnp.mean(jnp.stack(outs[begin_eval:]), axis=0)
    return jax.nn.log_softmax(out, axis=-1)


if __name__ == "__main__":
    # Small config consistent with the module: MNIST-like input, few time steps.
    B, C, H, W = 2, 1, 28, 28
    n_time_steps, begin_eval = 8, 2

    key = jax.random.PRNGKey(0)
    k_x, k_r, k_w1, k_b1, k_w2, k_b2 = jax.random.split(key, 6)

    x = jax.random.normal(k_x, (B, C, H, W), dtype=jnp.float32)

    # Random activation for InputDataToSpikingPerceptronLayer, one draw per
    # time step (precomputed here; the elementwise multiply happens in-kernel).
    # TODO(synk): torch.rand's per-call host RNG has no in-kernel equivalent;
    # randoms are precomputed and passed in so semantics are reproducible.
    rand_tbi = jax.random.uniform(k_r, (n_time_steps, B, N_INPUTS),
                                  dtype=jnp.float32)

    # Deterministic parameter init (xavier-uniform weights, small biases),
    # matching nn.Linear + xavier_uniform_ of the module.
    def xavier(k, fan_in, fan_out):
        bound = float(np.sqrt(6.0 / (fan_in + fan_out)))
        return jax.random.uniform(k, (fan_in, fan_out), jnp.float32,
                                  -bound, bound)

    w1 = xavier(k_w1, N_INPUTS, N_HIDDEN1)                 # (784, 100)
    b1 = jax.random.uniform(k_b1, (1, N_HIDDEN1), jnp.float32,
                            -1.0 / np.sqrt(N_INPUTS), 1.0 / np.sqrt(N_INPUTS))
    w2 = xavier(k_w2, N_HIDDEN1, N_HIDDEN2)                # (100, 10)
    b2 = jax.random.uniform(k_b2, (1, N_HIDDEN2), jnp.float32,
                            -1.0 / np.sqrt(N_HIDDEN1), 1.0 / np.sqrt(N_HIDDEN1))

    out = spiking_net_forward(x, rand_tbi, w1, b1, w2, b2,
                              n_time_steps=n_time_steps,
                              begin_eval=begin_eval)
    out = jax.block_until_ready(out)

    ref = _reference_forward(x, rand_tbi, w1, b1, w2, b2,
                             n_time_steps=n_time_steps,
                             begin_eval=begin_eval)
    np.testing.assert_allclose(np.asarray(out), np.asarray(ref),
                               rtol=2e-2, atol=2e-2)

    print("KERNEL_OK")
</pallas_src>

<mosaic_0001>
module attributes {stable_mosaic.version = 11 : i64} {
  func.func @_spiking_kernel(%arg0: memref<8x8x784xf32, #tpu.memory_space<vmem>>, %arg1: memref<8x784xf32, #tpu.memory_space<vmem>>, %arg2: memref<784x100xf32, #tpu.memory_space<vmem>>, %arg3: memref<1x100xf32, #tpu.memory_space<vmem>>, %arg4: memref<100x10xf32, #tpu.memory_space<vmem>>, %arg5: memref<1x10xf32, #tpu.memory_space<vmem>>, %arg6: memref<8x10xf32, #tpu.memory_space<vmem>>, %arg7: memref<64x100xf32, #tpu.memory_space<vmem>>) attributes {dimension_semantics = [], scalar_prefetch = 0 : i64, scratch_operands = 1 : i64, tpu.core_type = #tpu.core_type<tc>} {
    %c0 = arith.constant 0 : index
    %c0_0 = arith.constant 0 : index
    %c0_1 = arith.constant 0 : index
    %0 = vector.load %arg0[%c0, %c0_0, %c0_1] : memref<8x8x784xf32, #tpu.memory_space<vmem>>, vector<8x8x784xf32>
    %c0_2 = arith.constant 0 : index
    %c0_3 = arith.constant 0 : index
    %1 = vector.load %arg1[%c0_2, %c0_3] : memref<8x784xf32, #tpu.memory_space<vmem>>, vector<8x784xf32>
    %2 = vector.shape_cast %1 : vector<8x784xf32> to vector<1x8x784xf32>
    %3 = vector.broadcast %2 : vector<1x8x784xf32> to vector<8x8x784xf32>
    %4 = arith.mulf %0, %3 : vector<8x8x784xf32>
    %5 = vector.shape_cast %4 : vector<8x8x784xf32> to vector<64x784xf32>
    %c0_4 = arith.constant 0 : index
    %c0_5 = arith.constant 0 : index
    %6 = vector.load %arg2[%c0_4, %c0_5] : memref<784x100xf32, #tpu.memory_space<vmem>>, vector<784x100xf32>
    %cst = arith.constant dense<0.000000e+00> : vector<64x100xf32>
    %7 = tpu.matmul %5, %6, %cst {dimension_numbers = #tpu.dot_dimension_numbers<[1], [0], [0], [1], [0, 0, 1, 1], [], []>} : vector<64x784xf32>, vector<784x100xf32>, vector<64x100xf32> -> vector<64x100xf32>
    %c0_6 = arith.constant 0 : index
    %c0_7 = arith.constant 0 : index
    %8 = vector.load %arg3[%c0_6, %c0_7] : memref<1x100xf32, #tpu.memory_space<vmem>>, vector<1x100xf32>
    %9 = vector.broadcast %8 : vector<1x100xf32> to vector<64x100xf32>
    %10 = arith.addf %7, %9 : vector<64x100xf32>
    %cst_8 = arith.constant 0.000000e+00 : f32
    %11 = vector.broadcast %cst_8 : f32 to vector<8x100xf32>
    %c0_9 = arith.constant 0 : index
    %c0_10 = arith.constant 0 : index
    %12 = vector.load %arg7[%c0_9, %c0_10] : memref<64x100xf32, #tpu.memory_space<vmem>>, vector<8x100xf32>
    tpu.vector_store %arg7[%c0_9, %c0_10], %11 {strides = array<i32>} : memref<64x100xf32, #tpu.memory_space<vmem>>, vector<8x100xf32>,
    %13 = vector.extract_strided_slice %10 {offsets = [0, 0], sizes = [8, 100], strides = [1, 1]} : vector<64x100xf32> to vector<8x100xf32>
    %cst_11 = arith.constant 0.899999976 : f32
    %14 = vector.broadcast %cst_11 : f32 to vector<8x100xf32>
    %15 = arith.mulf %11, %14 : vector<8x100xf32>
    %16 = arith.addf %13, %15 : vector<8x100xf32>
    %cst_12 = arith.constant 1.000000e+00 : f32
    %17 = vector.broadcast %cst_12 : f32 to vector<8x100xf32>
    %18 = arith.subf %16, %17 : vector<8x100xf32>
    %cst_13 = arith.constant 0.000000e+00 : f32
    %19 = vector.broadcast %cst_13 : f32 to vector<8x100xf32>
    %20 = arith.maximumf %18, %19 : vector<8x100xf32>
    %cst_14 = arith.constant 0.000000e+00 : f32
    %21 = vector.broadcast %cst_14 : f32 to vector<8x100xf32>
    %22 = arith.cmpf ogt, %20, %21 : vector<8x100xf32>
    %23 = arith.extui %22 : vector<8x100xi1> to vector<8x100xi32>
    %24 = arith.sitofp %23 : vector<8x100xi32> to vector<8x100xf32>
    %cst_15 = arith.constant 1.500000e+00 : f32
    %25 = vector.broadcast %cst_15 : f32 to vector<8x100xf32>
    %26 = arith.mulf %25, %16 : vector<8x100xf32>
    %27 = arith.mulf %26, %24 : vector<8x100xf32>
    %28 = arith.subf %16, %27 : vector<8x100xf32>
    %c8 = arith.constant 8 : index
    %c0_16 = arith.constant 0 : index
    %29 = vector.load %arg7[%c8, %c0_16] : memref<64x100xf32, #tpu.memory_space<vmem>>, vector<8x100xf32>
    tpu.vector_store %arg7[%c8, %c0_16], %20 {strides = array<i32>} : memref<64x100xf32, #tpu.memory_space<vmem>>, vector<8x100xf32>,
    %30 = vector.extract_strided_slice %10 {offsets = [8, 0], sizes = [8, 100], strides = [1, 1]} : vector<64x100xf32> to vector<8x100xf32>
    %cst_17 = arith.constant 0.899999976 : f32
    %31 = vector.broadcast %cst_17 : f32 to vector<8x100xf32>
    %32 = arith.mulf %28, %31 : vector<8x100xf32>
    %33 = arith.addf %30, %32 : vector<8x100xf32>
    %cst_18 = arith.constant 1.000000e+00 : f32
    %34 = vector.broadcast %cst_18 : f32 to vector<8x100xf32>
    %35 = arith.subf %33, %34 : vector<8x100xf32>
    %cst_19 = arith.constant 0.000000e+00 : f32
    %36 = vector.broadcast %cst_19 : f32 to vector<8x100xf32>
    %37 = arith.maximumf %35, %36 : vector<8x100xf32>
    %cst_20 = arith.constant 0.000000e+00 : f32
    %38 = vector.broadcast %cst_20 : f32 to vector<8x100xf32>
    %39 = arith.cmpf ogt, %37, %38 : vector<8x100xf32>
    %40 = arith.extui %39 : vector<8x100xi1> to vector<8x100xi32>
    %41 = arith.sitofp %40 : vector<8x100xi32> to vector<8x100xf32>
    %cst_21 = arith.constant 1.500000e+00 : f32
    %42 = vector.broadcast %cst_21 : f32 to vector<8x100xf32>
    %43 = arith.mulf %42, %33 : vector<8x100xf32>
    %44 = arith.mulf %43, %41 : vector<8x100xf32>
    %45 = arith.subf %33, %44 : vector<8x100xf32>
    %c16 = arith.constant 16 : index
    %c0_22 = arith.constant 0 : index
    %46 = vector.load %arg7[%c16, %c0_22] : memref<64x100xf32, #tpu.memory_space<vmem>>, vector<8x100xf32>
    tpu.vector_store %arg7[%c16, %c0_22], %37 {strides = array<i32>} : memref<64x100xf32, #tpu.memory_space<vmem>>, vector<8x100xf32>,
    %47 = vector.extract_strided_slice %10 {offsets = [16, 0], sizes = [8, 100], strides = [1, 1]} : vector<64x100xf32> to vector<8x100xf32>
    %cst_23 = arith.constant 0.899999976 : f32
    %48 = vector.broadcast %cst_23 : f32 to vector<8x100xf32>
    %49 = arith.mulf %45, %48 : vector<8x100xf32>
    %50 = arith.addf %47, %49 : vector<8x100xf32>
    %cst_24 = arith.constant 1.000000e+00 : f32
    %51 = vector.broadcast %cst_24 : f32 to vector<8x100xf32>
    %52 = arith.subf %50, %51 : vector<8x100xf32>
    %cst_25 = arith.constant 0.000000e+00 : f32
    %53 = vector.broadcast %cst_25 : f32 to vector<8x100xf32>
    %54 = arith.maximumf %52, %53 : vector<8x100xf32>
    %cst_26 = arith.constant 0.000000e+00 : f32
    %55 = vector.broadcast %cst_26 : f32 to vector<8x100xf32>
    %56 = arith.cmpf ogt, %54, %55 : vector<8x100xf32>
    %57 = arith.extui %56 : vector<8x100xi1> to vector<8x100xi32>
    %58 = arith.sitofp %57 : vector<8x100xi32> to vector<8x100xf32>
    %cst_27 = arith.constant 1.500000e+00 : f32
    %59 = vector.broadcast %cst_27 : f32 to vector<8x100xf32>
    %60 = arith.mulf %59, %50 : vector<8x100xf32>
    %61 = arith.mulf %60, %58 : vector<8x100xf32>
    %62 = arith.subf %50, %61 : vector<8x100xf32>
    %c24 = arith.constant 24 : index
    %c0_28 = arith.constant 0 : index
    %63 = vector.load %arg7[%c24, %c0_28] : memref<64x100xf32, #tpu.memory_space<vmem>>, vector<8x100xf32>
    tpu.vector_store %arg7[%c24, %c0_28], %54 {strides = array<i32>} : memref<64x100xf32, #tpu.memory_space<vmem>>, vector<8x100xf32>,
    %64 = vector.extract_strided_slice %10 {offsets = [24, 0], sizes = [8, 100], strides = [1, 1]} : vector<64x100xf32> to vector<8x100xf32>
    %cst_29 = arith.constant 0.899999976 : f32
    %65 = vector.broadcast %cst_29 : f32 to vector<8x100xf32>
    %66 = arith.mulf %62, %65 : vector<8x100xf32>
    %67 = arith.addf %64, %66 : vector<8x100xf32>
    %cst_30 = arith.constant 1.000000e+00 : f32
    %68 = vector.broadcast %cst_30 : f32 to vector<8x100xf32>
    %69 = arith.subf %67, %68 : vector<8x100xf32>
    %cst_31 = arith.constant 0.000000e+00 : f32
    %70 = vector.broadcast %cst_31 : f32 to vector<8x100xf32>
    %71 = arith.maximumf %69, %70 : vector<8x100xf32>
    %cst_32 = arith.constant 0.000000e+00 : f32
    %72 = vector.broadcast %cst_32 : f32 to vector<8x100xf32>
    %73 = arith.cmpf ogt, %71, %72 : vector<8x100xf32>
    %74 = arith.extui %73 : vector<8x100xi1> to vector<8x100xi32>
    %75 = arith.sitofp %74 : vector<8x100xi32> to vector<8x100xf32>
    %cst_33 = arith.constant 1.500000e+00 : f32
    %76 = vector.broadcast %cst_33 : f32 to vector<8x100xf32>
    %77 = arith.mulf %76, %67 : vector<8x100xf32>
    %78 = arith.mulf %77, %75 : vector<8x100xf32>
    %79 = arith.subf %67, %78 : vector<8x100xf32>
    %c32 = arith.constant 32 : index
    %c0_34 = arith.constant 0 : index
    %80 = vector.load %arg7[%c32, %c0_34] : memref<64x100xf32, #tpu.memory_space<vmem>>, vector<8x100xf32>
    tpu.vector_store %arg7[%c32, %c0_34], %71 {strides = array<i32>} : memref<64x100xf32, #tpu.memory_space<vmem>>, vector<8x100xf32>,
    %81 = vector.extract_strided_slice %10 {offsets = [32, 0], sizes = [8, 100], strides = [1, 1]} : vector<64x100xf32> to vector<8x100xf32>
    %cst_35 = arith.constant 0.899999976 : f32
    %82 = vector.broadcast %cst_35 : f32 to vector<8x100xf32>
    %83 = arith.mulf %79, %82 : vector<8x100xf32>
    %84 = arith.addf %81, %83 : vector<8x100xf32>
    %cst_36 = arith.constant 1.000000e+00 : f32
    %85 = vector.broadcast %cst_36 : f32 to vector<8x100xf32>
    %86 = arith.subf %84, %85 : vector<8x100xf32>
    %cst_37 = arith.constant 0.000000e+00 : f32
    %87 = vector.broadcast %cst_37 : f32 to vector<8x100xf32>
    %88 = arith.maximumf %86, %87 : vector<8x100xf32>
    %cst_38 = arith.constant 0.000000e+00 : f32
    %89 = vector.broadcast %cst_38 : f32 to vector<8x100xf32>
    %90 = arith.cmpf ogt, %88, %89 : vector<8x100xf32>
    %91 = arith.extui %90 : vector<8x100xi1> to vector<8x100xi32>
    %92 = arith.sitofp %91 : vector<8x100xi32> to vector<8x100xf32>
    %cst_39 = arith.constant 1.500000e+00 : f32
    %93 = vector.broadcast %cst_39 : f32 to vector<8x100xf32>
    %94 = arith.mulf %93, %84 : vector<8x100xf32>
    %95 = arith.mulf %94, %92 : vector<8x100xf32>
    %96 = arith.subf %84, %95 : vector<8x100xf32>
    %c40 = arith.constant 40 : index
    %c0_40 = arith.constant 0 : index
    %97 = vector.load %arg7[%c40, %c0_40] : memref<64x100xf32, #tpu.memory_space<vmem>>, vector<8x100xf32>
    tpu.vector_store %arg7[%c40, %c0_40], %88 {strides = array<i32>} : memref<64x100xf32, #tpu.memory_space<vmem>>, vector<8x100xf32>,
    %98 = vector.extract_strided_slice %10 {offsets = [40, 0], sizes = [8, 100], strides = [1, 1]} : vector<64x100xf32> to vector<8x100xf32>
    %cst_41 = arith.constant 0.899999976 : f32
    %99 = vector.broadcast %cst_41 : f32 to vector<8x100xf32>
    %100 = arith.mulf %96, %99 : vector<8x100xf32>
    %101 = arith.addf %98, %100 : vector<8x100xf32>
    %cst_42 = arith.constant 1.000000e+00 : f32
    %102 = vector.broadcast %cst_42 : f32 to vector<8x100xf32>
    %103 = arith.subf %101, %102 : vector<8x100xf32>
    %cst_43 = arith.constant 0.000000e+00 : f32
    %104 = vector.broadcast %cst_43 : f32 to vector<8x100xf32>
    %105 = arith.maximumf %103, %104 : vector<8x100xf32>
    %cst_44 = arith.constant 0.000000e+00 : f32
    %106 = vector.broadcast %cst_44 : f32 to vector<8x100xf32>
    %107 = arith.cmpf ogt, %105, %106 : vector<8x100xf32>
    %108 = arith.extui %107 : vector<8x100xi1> to vector<8x100xi32>
    %109 = arith.sitofp %108 : vector<8x100xi32> to vector<8x100xf32>
    %cst_45 = arith.constant 1.500000e+00 : f32
    %110 = vector.broadcast %cst_45 : f32 to vector<8x100xf32>
    %111 = arith.mulf %110, %101 : vector<8x100xf32>
    %112 = arith.mulf %111, %109 : vector<8x100xf32>
    %113 = arith.subf %101, %112 : vector<8x100xf32>
    %c48 = arith.constant 48 : index
    %c0_46 = arith.constant 0 : index
    %114 = vector.load %arg7[%c48, %c0_46] : memref<64x100xf32, #tpu.memory_space<vmem>>, vector<8x100xf32>
    tpu.vector_store %arg7[%c48, %c0_46], %105 {strides = array<i32>} : memref<64x100xf32, #tpu.memory_space<vmem>>, vector<8x100xf32>,
    %115 = vector.extract_strided_slice %10 {offsets = [48, 0], sizes = [8, 100], strides = [1, 1]} : vector<64x100xf32> to vector<8x100xf32>
    %cst_47 = arith.constant 0.899999976 : f32
    %116 = vector.broadcast %cst_47 : f32 to vector<8x100xf32>
    %117 = arith.mulf %113, %116 : vector<8x100xf32>
    %118 = arith.addf %115, %117 : vector<8x100xf32>
    %cst_48 = arith.constant 1.000000e+00 : f32
    %119 = vector.broadcast %cst_48 : f32 to vector<8x100xf32>
    %120 = arith.subf %118, %119 : vector<8x100xf32>
    %cst_49 = arith.constant 0.000000e+00 : f32
    %121 = vector.broadcast %cst_49 : f32 to vector<8x100xf32>
    %122 = arith.maximumf %120, %121 : vector<8x100xf32>
    %c56 = arith.constant 56 : index
    %c0_50 = arith.constant 0 : index
    %123 = vector.load %arg7[%c56, %c0_50] : memref<64x100xf32, #tpu.memory_space<vmem>>, vector<8x100xf32>
    tpu.vector_store %arg7[%c56, %c0_50], %122 {strides = array<i32>} : memref<64x100xf32, #tpu.memory_space<vmem>>, vector<8x100xf32>,
    %c0_51 = arith.constant 0 : index
    %c0_52 = arith.constant 0 : index
    %124 = vector.load %arg7[%c0_51, %c0_52] : memref<64x100xf32, #tpu.memory_space<vmem>>, vector<64x100xf32>
    %c0_53 = arith.constant 0 : index
    %c0_54 = arith.constant 0 : index
    %125 = vector.load %arg4[%c0_53, %c0_54] : memref<100x10xf32, #tpu.memory_space<vmem>>, vector<100x10xf32>
    %cst_55 = arith.constant dense<0.000000e+00> : vector<64x10xf32>
    %126 = tpu.matmul %124, %125, %cst_55 {dimension_numbers = #tpu.dot_dimension_numbers<[1], [0], [0], [1], [0, 0, 1, 1], [], []>} : vector<64x100xf32>, vector<100x10xf32>, vector<64x10xf32> -> vector<64x10xf32>
    %c0_56 = arith.constant 0 : index
    %c0_57 = arith.constant 0 : index
    %127 = vector.load %arg5[%c0_56, %c0_57] : memref<1x10xf32, #tpu.memory_space<vmem>>, vector<1x10xf32>
    %128 = vector.broadcast %127 : vector<1x10xf32> to vector<64x10xf32>
    %129 = arith.addf %126, %128 : vector<64x10xf32>
    %cst_58 = arith.constant 0.000000e+00 : f32
    %130 = vector.broadcast %cst_58 : f32 to vector<8x10xf32>
    %cst_59 = arith.constant 0.000000e+00 : f32
    %131 = vector.broadcast %cst_59 : f32 to vector<8x10xf32>
    %132 = vector.extract_strided_slice %129 {offsets = [0, 0], sizes = [8, 10], strides = [1, 1]} : vector<64x10xf32> to vector<8x10xf32>
    %cst_60 = arith.constant 0.899999976 : f32
    %133 = vector.broadcast %cst_60 : f32 to vector<8x10xf32>
    %134 = arith.mulf %130, %133 : vector<8x10xf32>
    %135 = arith.addf %132, %134 : vector<8x10xf32>
    %cst_61 = arith.constant 1.000000e+00 : f32
    %136 = vector.broadcast %cst_61 : f32 to vector<8x10xf32>
    %137 = arith.subf %135, %136 : vector<8x10xf32>
    %cst_62 = arith.constant 0.000000e+00 : f32
    %138 = vector.broadcast %cst_62 : f32 to vector<8x10xf32>
    %139 = arith.maximumf %137, %138 : vector<8x10xf32>
    %cst_63 = arith.constant 0.000000e+00 : f32
    %140 = vector.broadcast %cst_63 : f32 to vector<8x10xf32>
    %141 = arith.cmpf ogt, %139, %140 : vector<8x10xf32>
    %142 = arith.extui %141 : vector<8x10xi1> to vector<8x10xi32>
    %143 = arith.sitofp %142 : vector<8x10xi32> to vector<8x10xf32>
    %cst_64 = arith.constant 1.500000e+00 : f32
    %144 = vector.broadcast %cst_64 : f32 to vector<8x10xf32>
    %145 = arith.mulf %144, %135 : vector<8x10xf32>
    %146 = arith.mulf %145, %143 : vector<8x10xf32>
    %147 = arith.subf %135, %146 : vector<8x10xf32>
    %148 = vector.extract_strided_slice %129 {offsets = [8, 0], sizes = [8, 10], strides = [1, 1]} : vector<64x10xf32> to vector<8x10xf32>
    %cst_65 = arith.constant 0.899999976 : f32
    %149 = vector.broadcast %cst_65 : f32 to vector<8x10xf32>
    %150 = arith.mulf %147, %149 : vector<8x10xf32>
    %151 = arith.addf %148, %150 : vector<8x10xf32>
    %cst_66 = arith.constant 1.000000e+00 : f32
    %152 = vector.broadcast %cst_66 : f32 to vector<8x10xf32>
    %153 = arith.subf %151, %152 : vector<8x10xf32>
    %cst_67 = arith.constant 0.000000e+00 : f32
    %154 = vector.broadcast %cst_67 : f32 to vector<8x10xf32>
    %155 = arith.maximumf %153, %154 : vector<8x10xf32>
    %cst_68 = arith.constant 0.000000e+00 : f32
    %156 = vector.broadcast %cst_68 : f32 to vector<8x10xf32>
    %157 = arith.cmpf ogt, %155, %156 : vector<8x10xf32>
    %158 = arith.extui %157 : vector<8x10xi1> to vector<8x10xi32>
    %159 = arith.sitofp %158 : vector<8x10xi32> to vector<8x10xf32>
    %cst_69 = arith.constant 1.500000e+00 : f32
    %160 = vector.broadcast %cst_69 : f32 to vector<8x10xf32>
    %161 = arith.mulf %160, %151 : vector<8x10xf32>
    %162 = arith.mulf %161, %159 : vector<8x10xf32>
    %163 = arith.subf %151, %162 : vector<8x10xf32>
    %164 = arith.addf %131, %163 : vector<8x10xf32>
    %165 = vector.extract_strided_slice %129 {offsets = [16, 0], sizes = [8, 10], strides = [1, 1]} : vector<64x10xf32> to vector<8x10xf32>
    %cst_70 = arith.constant 0.899999976 : f32
    %166 = vector.broadcast %cst_70 : f32 to vector<8x10xf32>
    %167 = arith.mulf %163, %166 : vector<8x10xf32>
    %168 = arith.addf %165, %167 : vector<8x10xf32>
    %cst_71 = arith.constant 1.000000e+00 : f32
    %169 = vector.broadcast %cst_71 : f32 to vector<8x10xf32>
    %170 = arith.subf %168, %169 : vector<8x10xf32>
    %cst_72 = arith.constant 0.000000e+00 : f32
    %171 = vector.broadcast %cst_72 : f32 to vector<8x10xf32>
    %172 = arith.maximumf %170, %171 : vector<8x10xf32>
    %cst_73 = arith.constant 0.000000e+00 : f32
    %173 = vector.broadcast %cst_73 : f32 to vector<8x10xf32>
    %174 = arith.cmpf ogt, %172, %173 : vector<8x10xf32>
    %175 = arith.extui %174 : vector<8x10xi1> to vector<8x10xi32>
    %176 = arith.sitofp %175 : vector<8x10xi32> to vector<8x10xf32>
    %cst_74 = arith.constant 1.500000e+00 : f32
    %177 = vector.broadcast %cst_74 : f32 to vector<8x10xf32>
    %178 = arith.mulf %177, %168 : vector<8x10xf32>
    %179 = arith.mulf %178, %176 : vector<8x10xf32>
    %180 = arith.subf %168, %179 : vector<8x10xf32>
    %181 = arith.addf %164, %180 : vector<8x10xf32>
    %182 = vector.extract_strided_slice %129 {offsets = [24, 0], sizes = [8, 10], strides = [1, 1]} : vector<64x10xf32> to vector<8x10xf32>
    %cst_75 = arith.constant 0.899999976 : f32
    %183 = vector.broadcast %cst_75 : f32 to vector<8x10xf32>
    %184 = arith.mulf %180, %183 : vector<8x10xf32>
    %185 = arith.addf %182, %184 : vector<8x10xf32>
    %cst_76 = arith.constant 1.000000e+00 : f32
    %186 = vector.broadcast %cst_76 : f32 to vector<8x10xf32>
    %187 = arith.subf %185, %186 : vector<8x10xf32>
    %cst_77 = arith.constant 0.000000e+00 : f32
    %188 = vector.broadcast %cst_77 : f32 to vector<8x10xf32>
    %189 = arith.maximumf %187, %188 : vector<8x10xf32>
    %cst_78 = arith.constant 0.000000e+00 : f32
    %190 = vector.broadcast %cst_78 : f32 to vector<8x10xf32>
    %191 = arith.cmpf ogt, %189, %190 : vector<8x10xf32>
    %192 = arith.extui %191 : vector<8x10xi1> to vector<8x10xi32>
    %193 = arith.sitofp %192 : vector<8x10xi32> to vector<8x10xf32>
    %cst_79 = arith.constant 1.500000e+00 : f32
    %194 = vector.broadcast %cst_79 : f32 to vector<8x10xf32>
    %195 = arith.mulf %194, %185 : vector<8x10xf32>
    %196 = arith.mulf %195, %193 : vector<8x10xf32>
    %197 = arith.subf %185, %196 : vector<8x10xf32>
    %198 = arith.addf %181, %197 : vector<8x10xf32>
    %199 = vector.extract_strided_slice %129 {offsets = [32, 0], sizes = [8, 10], strides = [1, 1]} : vector<64x10xf32> to vector<8x10xf32>
    %cst_80 = arith.constant 0.899999976 : f32
    %200 = vector.broadcast %cst_80 : f32 to vector<8x10xf32>
    %201 = arith.mulf %197, %200 : vector<8x10xf32>
    %202 = arith.addf %199, %201 : vector<8x10xf32>
    %cst_81 = arith.constant 1.000000e+00 : f32
    %203 = vector.broadcast %cst_81 : f32 to vector<8x10xf32>
    %204 = arith.subf %202, %203 : vector<8x10xf32>
    %cst_82 = arith.constant 0.000000e+00 : f32
    %205 = vector.broadcast %cst_82 : f32 to vector<8x10xf32>
    %206 = arith.maximumf %204, %205 : vector<8x10xf32>
    %cst_83 = arith.constant 0.000000e+00 : f32
    %207 = vector.broadcast %cst_83 : f32 to vector<8x10xf32>
    %208 = arith.cmpf ogt, %206, %207 : vector<8x10xf32>
    %209 = arith.extui %208 : vector<8x10xi1> to vector<8x10xi32>
    %210 = arith.sitofp %209 : vector<8x10xi32> to vector<8x10xf32>
    %cst_84 = arith.constant 1.500000e+00 : f32
    %211 = vector.broadcast %cst_84 : f32 to vector<8x10xf32>
    %212 = arith.mulf %211, %202 : vector<8x10xf32>
    %213 = arith.mulf %212, %210 : vector<8x10xf32>
    %214 = arith.subf %202, %213 : vector<8x10xf32>
    %215 = arith.addf %198, %214 : vector<8x10xf32>
    %216 = vector.extract_strided_slice %129 {offsets = [40, 0], sizes = [8, 10], strides = [1, 1]} : vector<64x10xf32> to vector<8x10xf32>
    %cst_85 = arith.constant 0.899999976 : f32
    %217 = vector.broadcast %cst_85 : f32 to vector<8x10xf32>
    %218 = arith.mulf %214, %217 : vector<8x10xf32>
    %219 = arith.addf %216, %218 : vector<8x10xf32>
    %cst_86 = arith.constant 1.000000e+00 : f32
    %220 = vector.broadcast %cst_86 : f32 to vector<8x10xf32>
    %221 = arith.subf %219, %220 : vector<8x10xf32>
    %cst_87 = arith.constant 0.000000e+00 : f32
    %222 = vector.broadcast %cst_87 : f32 to vector<8x10xf32>
    %223 = arith.maximumf %221, %222 : vector<8x10xf32>
    %cst_88 = arith.constant 0.000000e+00 : f32
    %224 = vector.broadcast %cst_88 : f32 to vector<8x10xf32>
    %225 = arith.cmpf ogt, %223, %224 : vector<8x10xf32>
    %226 = arith.extui %225 : vector<8x10xi1> to vector<8x10xi32>
    %227 = arith.sitofp %226 : vector<8x10xi32> to vector<8x10xf32>
    %cst_89 = arith.constant 1.500000e+00 : f32
    %228 = vector.broadcast %cst_89 : f32 to vector<8x10xf32>
    %229 = arith.mulf %228, %219 : vector<8x10xf32>
    %230 = arith.mulf %229, %227 : vector<8x10xf32>
    %231 = arith.subf %219, %230 : vector<8x10xf32>
    %232 = arith.addf %215, %231 : vector<8x10xf32>
    %233 = vector.extract_strided_slice %129 {offsets = [48, 0], sizes = [8, 10], strides = [1, 1]} : vector<64x10xf32> to vector<8x10xf32>
    %cst_90 = arith.constant 0.899999976 : f32
    %234 = vector.broadcast %cst_90 : f32 to vector<8x10xf32>
    %235 = arith.mulf %231, %234 : vector<8x10xf32>
    %236 = arith.addf %233, %235 : vector<8x10xf32>
    %cst_91 = arith.constant 1.000000e+00 : f32
    %237 = vector.broadcast %cst_91 : f32 to vector<8x10xf32>
    %238 = arith.subf %236, %237 : vector<8x10xf32>
    %cst_92 = arith.constant 0.000000e+00 : f32
    %239 = vector.broadcast %cst_92 : f32 to vector<8x10xf32>
    %240 = arith.maximumf %238, %239 : vector<8x10xf32>
    %cst_93 = arith.constant 0.000000e+00 : f32
    %241 = vector.broadcast %cst_93 : f32 to vector<8x10xf32>
    %242 = arith.cmpf ogt, %240, %241 : vector<8x10xf32>
    %243 = arith.extui %242 : vector<8x10xi1> to vector<8x10xi32>
    %244 = arith.sitofp %243 : vector<8x10xi32> to vector<8x10xf32>
    %cst_94 = arith.constant 1.500000e+00 : f32
    %245 = vector.broadcast %cst_94 : f32 to vector<8x10xf32>
    %246 = arith.mulf %245, %236 : vector<8x10xf32>
    %247 = arith.mulf %246, %244 : vector<8x10xf32>
    %248 = arith.subf %236, %247 : vector<8x10xf32>
    %249 = arith.addf %232, %248 : vector<8x10xf32>
    %cst_95 = arith.constant 0.166666672 : f32
    %250 = vector.broadcast %cst_95 : f32 to vector<8x10xf32>
    %251 = arith.mulf %249, %250 : vector<8x10xf32>
    %cst_96 = arith.constant dense<0xFF800000> : vector<8xf32>
    %252 = vector.multi_reduction <maximumf>, %251, %cst_96 [1] : vector<8x10xf32> to vector<8xf32>
    %253 = vector.shape_cast %252 : vector<8xf32> to vector<8x1xf32>
    %254 = vector.broadcast %253 : vector<8x1xf32> to vector<8x10xf32>
    %255 = arith.subf %251, %254 : vector<8x10xf32>
    %256 = math.exp %255 : vector<8x10xf32>
    %cst_97 = arith.constant dense<0.000000e+00> : vector<8xf32>
    %257 = vector.multi_reduction <add>, %256, %cst_97 [1] : vector<8x10xf32> to vector<8xf32>
    %258 = vector.shape_cast %257 : vector<8xf32> to vector<8x1xf32>
    %259 = math.log %258 : vector<8x1xf32>
    %260 = vector.broadcast %259 : vector<8x1xf32> to vector<8x10xf32>
    %261 = arith.subf %255, %260 : vector<8x10xf32>
    %c0_98 = arith.constant 0 : index
    %c0_99 = arith.constant 0 : index
    %262 = vector.load %arg6[%c0_98, %c0_99] : memref<8x10xf32, #tpu.memory_space<vmem>>, vector<8x10xf32>
    tpu.vector_store %arg6[%c0_98, %c0_99], %261 {strides = array<i32>} : memref<8x10xf32, #tpu.memory_space<vmem>>, vector<8x10xf32>,
    return
  }
}

</mosaic_0001>

<llo_original>
// kernel: tpu_custom_call.1
$region0: #{tpu_custom_call.1}
  #allocation0 [shape = 'u32[]', space=smem, size = 0x4, offset = 0x4, fixed_abs, tag = 'smem constant byte address 0x4 - core index']
  #allocation1 [shape = 'u32[72,128]{1,0:T(1,128)}', space=vmem, size = 0x9000, scoped, tag = 'internal scratch']
  #allocation2 [shape = 'f32[64,100]{1,0:T(8,128)}', space=vmem, size = 0x8000, scoped, tag = 'scratch operand']
  %s0 = inlined_call_operand.vmem [shape: f32[8,8,784], index: 0, kind: input, shape index: {}]
  %s1 = inlined_call_operand.vmem [shape: f32[8,784], index: 1, kind: input, shape index: {}]
  %s2 = inlined_call_operand.vmem [shape: f32[784,100], index: 2, kind: input, shape index: {}]
  %s3 = inlined_call_operand.vmem [shape: f32[1,100], index: 3, kind: input, shape index: {}]
  %s4 = inlined_call_operand.vmem [shape: f32[100,10], index: 4, kind: input, shape index: {}]
  %s5 = inlined_call_operand.vmem [shape: f32[1,10], index: 5, kind: input, shape index: {}]
  %s6 = inlined_call_operand.hbm [shape: f32[8,10], index: 6, kind: output, shape index: {}]
  %s7 = sld [smem:[#allocation0]]
  $region34: #{tpu_custom_call.1} parent=0
    _
  %s9 = ssub.s32 1, %s7
  %s10 = scalar_select 0, %s9, %s7
  $region1: #{tpu_custom_call.1} parent=0
    #allocation3 [shape = 'u8[4096]{0}', space=vmem, size = 0x1000, scoped, tag = 'output window, operand 0, single buffered']
    #allocation4 [shape = 's32[1]{0}', space=sflag, size = 0x4, scoped, tag = 'scoped memory for tpu_custom_call.1']
    %11 = vsyncpa [#allocation4], 0
    // Predicated region
    $region2: #{tpu_custom_call.1} parent=1 // pred_check
      _
    $region3: #{tpu_custom_call.1} parent=1 // pred_check_branch
      %13 = sbr.rel (0) target = $region5
    $region4: #{tpu_custom_call.1} parent=1 // pred_region
      _
    $region5: #{tpu_custom_call.1} parent=1 // pred_fallthru
      _
    // Predicated region
    $region6: #{tpu_custom_call.1} parent=1 // pred_check
      _
    $region7: #{tpu_custom_call.1} parent=1 // pred_check_branch
      %15 = sbr.rel (0) target = $region9
    $region8: #{tpu_custom_call.1} parent=1 // pred_region
      _
    $region9: #{tpu_custom_call.1} parent=1 // pred_fallthru
      _
    // Predicated region
    $region10: #{tpu_custom_call.1} parent=1 // pred_check
      _
    $region11: #{tpu_custom_call.1} parent=1 // pred_check_branch
      %17 = sbr.rel (0) target = $region13
    $region12: #{tpu_custom_call.1} parent=1 // pred_region
      _
    $region13: #{tpu_custom_call.1} parent=1 // pred_fallthru
      _
    // Predicated region
    $region14: #{tpu_custom_call.1} parent=1 // pred_check
      _
    $region15: #{tpu_custom_call.1} parent=1 // pred_check_branch
      %19 = sbr.rel (0) target = $region17
    $region16: #{tpu_custom_call.1} parent=1 // pred_region
      _
    $region17: #{tpu_custom_call.1} parent=1 // pred_fallthru
      _
    // Predicated region
    $region18: #{tpu_custom_call.1} parent=1 // pred_check
      _
    $region19: #{tpu_custom_call.1} parent=1 // pred_check_branch
      %21 = sbr.rel (0) target = $region21
    $region20: #{tpu_custom_call.1} parent=1 // pred_region
      _
    $region21: #{tpu_custom_call.1} parent=1 // pred_fallthru
      _
    // Predicated region
    $region22: #{tpu_custom_call.1} parent=1 // pred_check
      _
    $region23: #{tpu_custom_call.1} parent=1 // pred_check_branch
      %23 = sbr.rel (0) target = $region25
    $region24: #{tpu_custom_call.1} parent=1 // pred_region
      _
    $region25: #{tpu_custom_call.1} parent=1 // pred_fallthru
      _
    %v24 = vld [vmem:[%s0] sm:$0xff]
    %v25 = vld [vmem:[%s0 + $0x8] sm:$0xff]
    %v26 = vld [vmem:[%s0 + $0x10] sm:$0xff]
    %v27 = vld [vmem:[%s0 + $0x18] sm:$0xff]
    %v28 = vld [vmem:[%s0 + $0x20] sm:$0xff]
    %v29 = vld [vmem:[%s0 + $0x28] sm:$0xff]
    %v30 = vld [vmem:[%s0 + $0x30] sm:$0xff]
    %v31 = vld [vmem:[%s0 + $0x38] sm:$0xff]
    %v32 = vld [vmem:[%s0 + $0x40] sm:$0xff]
    %v33 = vld [vmem:[%s0 + $0x48] sm:$0xff]
    %v34 = vld [vmem:[%s0 + $0x50] sm:$0xff]
    %v35 = vld [vmem:[%s0 + $0x58] sm:$0xff]
    %v36 = vld [vmem:[%s0 + $0x60] sm:$0xff]
    %v37 = vld [vmem:[%s0 + $0x68] sm:$0xff]
    %v38 = vld [vmem:[%s0 + $0x70] sm:$0xff]
    %v39 = vld [vmem:[%s0 + $0x78] sm:$0xff]
    %v40 = vld [vmem:[%s0 + $0x80] sm:$0xff]
    %v41 = vld [vmem:[%s0 + $0x88] sm:$0xff]
    %v42 = vld [vmem:[%s0 + $0x90] sm:$0xff]
    %v43 = vld [vmem:[%s0 + $0x98] sm:$0xff]
    %v44 = vld [vmem:[%s0 + $0xa0] sm:$0xff]
    %v45 = vld [vmem:[%s0 + $0xa8] sm:$0xff]
    %v46 = vld [vmem:[%s0 + $0xb0] sm:$0xff]
    %v47 = vld [vmem:[%s0 + $0xb8] sm:$0xff]
    %v48 = vld [vmem:[%s0 + $0xc0] sm:$0xff]
    %v49 = vld [vmem:[%s0 + $0xc8] sm:$0xff]
    %v50 = vld [vmem:[%s0 + $0xd0] sm:$0xff]
    %v51 = vld [vmem:[%s0 + $0xd8] sm:$0xff]
    %v52 = vld [vmem:[%s0 + $0xe0] sm:$0xff]
    %v53 = vld [vmem:[%s0 + $0xe8] sm:$0xff]
    %v54 = vld [vmem:[%s0 + $0xf0] sm:$0xff]
    %v55 = vld [vmem:[%s0 + $0xf8] sm:$0xff]
    %v56 = vld [vmem:[%s0 + $0x100] sm:$0xff]
    %v57 = vld [vmem:[%s0 + $0x108] sm:$0xff]
    %v58 = vld [vmem:[%s0 + $0x110] sm:$0xff]
    %v59 = vld [vmem:[%s0 + $0x118] sm:$0xff]
    %v60 = vld [vmem:[%s0 + $0x120] sm:$0xff]
    %v61 = vld [vmem:[%s0 + $0x128] sm:$0xff]
    %v62 = vld [vmem:[%s0 + $0x130] sm:$0xff]
    %v63 = vld [vmem:[%s0 + $0x138] sm:$0xff]
    %v64 = vld [vmem:[%s0 + $0x140] sm:$0xff]
    %v65 = vld [vmem:[%s0 + $0x148] sm:$0xff]
    %v66 = vld [vmem:[%s0 + $0x150] sm:$0xff]
    %v67 = vld [vmem:[%s0 + $0x158] sm:$0xff]
    %v68 = vld [vmem:[%s0 + $0x160] sm:$0xff]
    %v69 = vld [vmem:[%s0 + $0x168] sm:$0xff]
    %v70 = vld [vmem:[%s0 + $0x170] sm:$0xff]
    %v71 = vld [vmem:[%s0 + $0x178] sm:$0xff]
    %v72 = vld [vmem:[%s0 + $0x180] sm:$0xff]
    %v73 = vld [vmem:[%s0 + $0x188] sm:$0xff]
    %v74 = vld [vmem:[%s0 + $0x190] sm:$0xff]
    %v75 = vld [vmem:[%s0 + $0x198] sm:$0xff]
    %v76 = vld [vmem:[%s0 + $0x1a0] sm:$0xff]
    %v77 = vld [vmem:[%s0 + $0x1a8] sm:$0xff]
    %v78 = vld [vmem:[%s0 + $0x1b0] sm:$0xff]
    %v79 = vld [vmem:[%s0 + $0x1b8] sm:$0xff]
    %v80 = vld [vmem:[%s1] sm:$0xff]
    %v81 = vld [vmem:[%s1 + $0x8] sm:$0xff]
    %v82 = vld [vmem:[%s1 + $0x10] sm:$0xff]
    %v83 = vld [vmem:[%s1 + $0x18] sm:$0xff]
    %v84 = vld [vmem:[%s1 + $0x20] sm:$0xff]
    %v85 = vld [vmem:[%s1 + $0x28] sm:$0xff]
    %v86 = vld [vmem:[%s1 + $0x30] sm:$0xff]
    %v87 = vmul.f32 %v24, %v80
    %v88 = vmul.f32 %v25, %v81
    %v89 = vmul.f32 %v26, %v82
    %v90 = vmul.f32 %v27, %v83
    %v91 = vmul.f32 %v28, %v84
    %v92 = vmul.f32 %v29, %v85
    %v93 = vmul.f32 %v30, %v86
    %v94 = vmul.f32 %v31, %v80
    %v95 = vmul.f32 %v32, %v81
    %v96 = vmul.f32 %v33, %v82
    %v97 = vmul.f32 %v34, %v83
    %v98 = vmul.f32 %v35, %v84
    %v99 = vmul.f32 %v36, %v85
    %v100 = vmul.f32 %v37, %v86
    %v101 = vmul.f32 %v38, %v80
    %v102 = vmul.f32 %v39, %v81
    %v103 = vmul.f32 %v40, %v82
    %v104 = vmul.f32 %v41, %v83
    %v105 = vmul.f32 %v42, %v84
    %v106 = vmul.f32 %v43, %v85
    %v107 = vmul.f32 %v44, %v86
    %v108 = vmul.f32 %v45, %v80
    %v109 = vmul.f32 %v46, %v81
    %v110 = vmul.f32 %v47, %v82
    %v111 = vmul.f32 %v48, %v83
    %v112 = vmul.f32 %v49, %v84
    %v113 = vmul.f32 %v50, %v85
    %v114 = vmul.f32 %v51, %v86
    %v115 = vmul.f32 %v52, %v80
    %v116 = vmul.f32 %v53, %v81
    %v117 = vmul.f32 %v54, %v82
    %v118 = vmul.f32 %v55, %v83
    %v119 = vmul.f32 %v56, %v84
    %v120 = vmul.f32 %v57, %v85
    %v121 = vmul.f32 %v58, %v86
    %v122 = vmul.f32 %v59, %v80
    %v123 = vmul.f32 %v60, %v81
    %v124 = vmul.f32 %v61, %v82
    %v125 = vmul.f32 %v62, %v83
    %v126 = vmul.f32 %v63, %v84
    %v127 = vmul.f32 %v64, %v85
    %v128 = vmul.f32 %v65, %v86
    %v129 = vmul.f32 %v66, %v80
    %v130 = vmul.f32 %v67, %v81
    %v131 = vmul.f32 %v68, %v82
    %v132 = vmul.f32 %v69, %v83
    %v133 = vmul.f32 %v70, %v84
    %v134 = vmul.f32 %v71, %v85
    %v135 = vmul.f32 %v72, %v86
    %v136 = vmul.f32 %v73, %v80
    %v137 = vmul.f32 %v74, %v81
    %v138 = vmul.f32 %v75, %v82
    %v139 = vmul.f32 %v76, %v83
    %v140 = vmul.f32 %v77, %v84
    %v141 = vmul.f32 %v78, %v85
    %v142 = vmul.f32 %v79, %v86
    %v143 = vld [vmem:[%s2] sm:$0xff]
    %v144 = vld [vmem:[%s2 + $0x8] sm:$0xff]
    %v145 = vld [vmem:[%s2 + $0x10] sm:$0xff]
    %v146 = vld [vmem:[%s2 + $0x18] sm:$0xff]
    %v147 = vld [vmem:[%s2 + $0x20] sm:$0xff]
    %v148 = vld [vmem:[%s2 + $0x28] sm:$0xff]
    %v149 = vld [vmem:[%s2 + $0x30] sm:$0xff]
    %v150 = vld [vmem:[%s2 + $0x38] sm:$0xff]
    %v151 = vld [vmem:[%s2 + $0x40] sm:$0xff]
    %v152 = vld [vmem:[%s2 + $0x48] sm:$0xff]
    %v153 = vld [vmem:[%s2 + $0x50] sm:$0xff]
    %v154 = vld [vmem:[%s2 + $0x58] sm:$0xff]
    %v155 = vld [vmem:[%s2 + $0x60] sm:$0xff]
    %v156 = vld [vmem:[%s2 + $0x68] sm:$0xff]
    %v157 = vld [vmem:[%s2 + $0x70] sm:$0xff]
    %v158 = vld [vmem:[%s2 + $0x78] sm:$0xff]
    %v159 = vld [vmem:[%s2 + $0x80] sm:$0xff]
    %v160 = vld [vmem:[%s2 + $0x88] sm:$0xff]
    %v161 = vld [vmem:[%s2 + $0x90] sm:$0xff]
    %v162 = vld [vmem:[%s2 + $0x98] sm:$0xff]
    %v163 = vld [vmem:[%s2 + $0xa0] sm:$0xff]
    %v164 = vld [vmem:[%s2 + $0xa8] sm:$0xff]
    %v165 = vld [vmem:[%s2 + $0xb0] sm:$0xff]
    %v166 = vld [vmem:[%s2 + $0xb8] sm:$0xff]
    %v167 = vld [vmem:[%s2 + $0xc0] sm:$0xff]
    %v168 = vld [vmem:[%s2 + $0xc8] sm:$0xff]
    %v169 = vld [vmem:[%s2 + $0xd0] sm:$0xff]
    %v170 = vld [vmem:[%s2 + $0xd8] sm:$0xff]
    %v171 = vld [vmem:[%s2 + $0xe0] sm:$0xff]
    %v172 = vld [vmem:[%s2 + $0xe8] sm:$0xff]
    %v173 = vld [vmem:[%s2 + $0xf0] sm:$0xff]
    %v174 = vld [vmem:[%s2 + $0xf8] sm:$0xff]
    %v175 = vld [vmem:[%s2 + $0x100] sm:$0xff]
    %v176 = vld [vmem:[%s2 + $0x108] sm:$0xff]
    %v177 = vld [vmem:[%s2 + $0x110] sm:$0xff]
    %v178 = vld [vmem:[%s2 + $0x118] sm:$0xff]
    %v179 = vld [vmem:[%s2 + $0x120] sm:$0xff]
    %v180 = vld [vmem:[%s2 + $0x128] sm:$0xff]
    %v181 = vld [vmem:[%s2 + $0x130] sm:$0xff]
    %v182 = vld [vmem:[%s2 + $0x138] sm:$0xff]
    %v183 = vld [vmem:[%s2 + $0x140] sm:$0xff]
    %v184 = vld [vmem:[%s2 + $0x148] sm:$0xff]
    %v185 = vld [vmem:[%s2 + $0x150] sm:$0xff]
    %v186 = vld [vmem:[%s2 + $0x158] sm:$0xff]
    %v187 = vld [vmem:[%s2 + $0x160] sm:$0xff]
    %v188 = vld [vmem:[%s2 + $0x168] sm:$0xff]
    %v189 = vld [vmem:[%s2 + $0x170] sm:$0xff]
    %v190 = vld [vmem:[%s2 + $0x178] sm:$0xff]
    %v191 = vld [vmem:[%s2 + $0x180] sm:$0xff]
    %v192 = vld [vmem:[%s2 + $0x188] sm:$0xff]
    %v193 = vld [vmem:[%s2 + $0x190] sm:$0xff]
    %v194 = vld [vmem:[%s2 + $0x198] sm:$0xff]
    %v195 = vld [vmem:[%s2 + $0x1a0] sm:$0xff]
    %v196 = vld [vmem:[%s2 + $0x1a8] sm:$0xff]
    %v197 = vld [vmem:[%s2 + $0x1b0] sm:$0xff]
    %v198 = vld [vmem:[%s2 + $0x1b8] sm:$0xff]
    %v199 = vld [vmem:[%s2 + $0x1c0] sm:$0xff]
    %v200 = vld [vmem:[%s2 + $0x1c8] sm:$0xff]
    %v201 = vld [vmem:[%s2 + $0x1d0] sm:$0xff]
    %v202 = vld [vmem:[%s2 + $0x1d8] sm:$0xff]
    %v203 = vld [vmem:[%s2 + $0x1e0] sm:$0xff]
    %v204 = vld [vmem:[%s2 + $0x1e8] sm:$0xff]
    %v205 = vld [vmem:[%s2 + $0x1f0] sm:$0xff]
    %v206 = vld [vmem:[%s2 + $0x1f8] sm:$0xff]
    %v207 = vld [vmem:[%s2 + $0x200] sm:$0xff]
    %v208 = vld [vmem:[%s2 + $0x208] sm:$0xff]
    %v209 = vld [vmem:[%s2 + $0x210] sm:$0xff]
    %v210 = vld [vmem:[%s2 + $0x218] sm:$0xff]
    %v211 = vld [vmem:[%s2 + $0x220] sm:$0xff]
    %v212 = vld [vmem:[%s2 + $0x228] sm:$0xff]
    %v213 = vld [vmem:[%s2 + $0x230] sm:$0xff]
    %v214 = vld [vmem:[%s2 + $0x238] sm:$0xff]
    %v215 = vld [vmem:[%s2 + $0x240] sm:$0xff]
    %v216 = vld [vmem:[%s2 + $0x248] sm:$0xff]
    %v217 = vld [vmem:[%s2 + $0x250] sm:$0xff]
    %v218 = vld [vmem:[%s2 + $0x258] sm:$0xff]
    %v219 = vld [vmem:[%s2 + $0x260] sm:$0xff]
    %v220 = vld [vmem:[%s2 + $0x268] sm:$0xff]
    %v221 = vld [vmem:[%s2 + $0x270] sm:$0xff]
    %v222 = vld [vmem:[%s2 + $0x278] sm:$0xff]
    %v223 = vld [vmem:[%s2 + $0x280] sm:$0xff]
    %v224 = vld [vmem:[%s2 + $0x288] sm:$0xff]
    %v225 = vld [vmem:[%s2 + $0x290] sm:$0xff]
    %v226 = vld [vmem:[%s2 + $0x298] sm:$0xff]
    %v227 = vld [vmem:[%s2 + $0x2a0] sm:$0xff]
    %v228 = vld [vmem:[%s2 + $0x2a8] sm:$0xff]
    %v229 = vld [vmem:[%s2 + $0x2b0] sm:$0xff]
    %v230 = vld [vmem:[%s2 + $0x2b8] sm:$0xff]
    %v231 = vld [vmem:[%s2 + $0x2c0] sm:$0xff]
    %v232 = vld [vmem:[%s2 + $0x2c8] sm:$0xff]
    %v233 = vld [vmem:[%s2 + $0x2d0] sm:$0xff]
    %v234 = vld [vmem:[%s2 + $0x2d8] sm:$0xff]
    %v235 = vld [vmem:[%s2 + $0x2e0] sm:$0xff]
    %v236 = vld [vmem:[%s2 + $0x2e8] sm:$0xff]
    %v237 = vld [vmem:[%s2 + $0x2f0] sm:$0xff]
    %v238 = vld [vmem:[%s2 + $0x2f8] sm:$0xff]
    %v239 = vld [vmem:[%s2 + $0x300] sm:$0xff]
    %v240 = vld [vmem:[%s2 + $0x308] sm:$0xff]
    %v241 = vld [vmem:[%s3] sm:$0x1]
    %v243 = vperm.slane %v241, 0
    %vm245 = vcmask 130048
    %v247 = vsel %vm245, %v93, 0
    %v250 = vsel %vm245, %v100, 0
    %v253 = vsel %vm245, %v107, 0
    %v256 = vsel %vm245, %v114, 0
    %v259 = vsel %vm245, %v121, 0
    %v262 = vsel %vm245, %v128, 0
    %v265 = vsel %vm245, %v135, 0
    %v268 = vsel %vm245, %v142, 0
    %270 = vmatpush.msra.mxu0 %v158
    %271 = vmatpush.msra.mxu0 %v157
    %272 = vmatpush.msra.mxu0 %v156
    %273 = vmatpush.msra.mxu0 %v155
    %274 = vmatpush.msra.mxu0 %v154
    %275 = vmatpush.msra.mxu0 %v153
    %276 = vmatpush.msra.mxu0 %v152
    %277 = vmatpush.msra.mxu0 %v151
    %278 = vmatpush.msra.mxu0 %v150
    %279 = vmatpush.msra.mxu0 %v149
    %280 = vmatpush.msra.mxu0 %v148
    %281 = vmatpush.msra.mxu0 %v147
    %282 = vmatpush.msra.mxu0 %v146
    %283 = vmatpush.msra.mxu0 %v145
    %284 = vmatpush.msra.mxu0 %v144
    %285 = vmatpush.msra.mxu0 %v143
    %286 = vmatmul.f32.gmra.mxu0 %v87
    %v287 = vpop.f32.mrf.mxu0
    %v288 = vadd.f32 %v243, %v287
    %289 = vmatmul.f32.gmra.mxu0 %v94
    %v290 = vpop.f32.mrf.mxu0
    %v291 = vadd.f32 %v243, %v290
    %292 = vmatmul.f32.gmra.mxu0 %v101
    %v293 = vpop.f32.mrf.mxu0
    %v294 = vadd.f32 %v243, %v293
    %295 = vmatmul.f32.gmra.mxu0 %v108
    %v296 = vpop.f32.mrf.mxu0
    %v297 = vadd.f32 %v243, %v296
    %298 = vmatmul.f32.gmra.mxu0 %v115
    %v299 = vpop.f32.mrf.mxu0
    %v300 = vadd.f32 %v243, %v299
    %301 = vmatmul.f32.gmra.mxu0 %v122
    %v302 = vpop.f32.mrf.mxu0
    %v303 = vadd.f32 %v243, %v302
    %304 = vmatmul.f32.gmra.mxu0 %v129
    %v305 = vpop.f32.mrf.mxu0
    %v306 = vadd.f32 %v243, %v305
    %307 = vmatmul.f32.gmra.mxu0 %v136
    %v308 = vpop.f32.mrf.mxu0
    %309 = vdwg.mxu0
    %310 = vmatpush.msra.mxu0 %v174
    %311 = vmatpush.msra.mxu0 %v173
    %312 = vmatpush.msra.mxu0 %v172
    %313 = vmatpush.msra.mxu0 %v171
    %314 = vmatpush.msra.mxu0 %v170
    %315 = vmatpush.msra.mxu0 %v169
    %316 = vmatpush.msra.mxu0 %v168
    %317 = vmatpush.msra.mxu0 %v167
    %318 = vmatpush.msra.mxu0 %v166
    %319 = vmatpush.msra.mxu0 %v165
    %320 = vmatpush.msra.mxu0 %v164
    %321 = vmatpush.msra.mxu0 %v163
    %322 = vmatpush.msra.mxu0 %v162
    %323 = vmatpush.msra.mxu0 %v161
    %324 = vmatpush.msra.mxu0 %v160
    %325 = vmatpush.msra.mxu0 %v159
    %326 = vmatmul.f32.gmra.mxu0 %v88
    %v327 = vpop.f32.mrf.mxu0
    %v328 = vadd.f32 %v288, %v327
    %329 = vmatmul.f32.gmra.mxu0 %v95
    %v330 = vpop.f32.mrf.mxu0
    %v331 = vadd.f32 %v291, %v330
    %332 = vmatmul.f32.gmra.mxu0 %v102
    %v333 = vpop.f32.mrf.mxu0
    %v334 = vadd.f32 %v294, %v333
    %335 = vmatmul.f32.gmra.mxu0 %v109
    %v336 = vpop.f32.mrf.mxu0
    %v337 = vadd.f32 %v297, %v336
    %338 = vmatmul.f32.gmra.mxu0 %v116
    %v339 = vpop.f32.mrf.mxu0
    %v340 = vadd.f32 %v300, %v339
    %341 = vmatmul.f32.gmra.mxu0 %v123
    %v342 = vpop.f32.mrf.mxu0
    %v343 = vadd.f32 %v303, %v342
    %344 = vmatmul.f32.gmra.mxu0 %v130
    %v345 = vpop.f32.mrf.mxu0
    %v346 = vadd.f32 %v306, %v345
    %347 = vmatmul.f32.gmra.mxu0 %v137
    %v348 = vpop.f32.mrf.mxu0
    %349 = vdwg.mxu0
    %350 = vmatpush.msra.mxu0 %v190
    %351 = vmatpush.msra.mxu0 %v189
    %352 = vmatpush.msra.mxu0 %v188
    %353 = vmatpush.msra.mxu0 %v187
    %354 = vmatpush.msra.mxu0 %v186
    %355 = vmatpush.msra.mxu0 %v185
    %356 = vmatpush.msra.mxu0 %v184
    %357 = vmatpush.msra.mxu0 %v183
    %358 = vmatpush.msra.mxu0 %v182
    %359 = vmatpush.msra.mxu0 %v181
    %360 = vmatpush.msra.mxu0 %v180
    %361 = vmatpush.msra.mxu0 %v179
    %362 = vmatpush.msra.mxu0 %v178
    %363 = vmatpush.msra.mxu0 %v177
    %364 = vmatpush.msra.mxu0 %v176
    %365 = vmatpush.msra.mxu0 %v175
    %366 = vmatmul.f32.gmra.mxu0 %v89
    %v367 = vpop.f32.mrf.mxu0
    %v368 = vadd.f32 %v328, %v367
    %369 = vmatmul.f32.gmra.mxu0 %v96
    %v370 = vpop.f32.mrf.mxu0
    %v371 = vadd.f32 %v331, %v370
    %372 = vmatmul.f32.gmra.mxu0 %v103
    %v373 = vpop.f32.mrf.mxu0
    %v374 = vadd.f32 %v334, %v373
    %375 = vmatmul.f32.gmra.mxu0 %v110
    %v376 = vpop.f32.mrf.mxu0
    %v377 = vadd.f32 %v337, %v376
    %378 = vmatmul.f32.gmra.mxu0 %v117
    %v379 = vpop.f32.mrf.mxu0
    %v380 = vadd.f32 %v340, %v379
    %381 = vmatmul.f32.gmra.mxu0 %v124
    %v382 = vpop.f32.mrf.mxu0
    %v383 = vadd.f32 %v343, %v382
    %384 = vmatmul.f32.gmra.mxu0 %v131
    %v385 = vpop.f32.mrf.mxu0
    %v386 = vadd.f32 %v346, %v385
    %387 = vmatmul.f32.gmra.mxu0 %v138
    %v388 = vpop.f32.mrf.mxu0
    %389 = vdwg.mxu0
    %390 = vmatpush.msra.mxu0 %v206
    %391 = vmatpush.msra.mxu0 %v205
    %392 = vmatpush.msra.mxu0 %v204
    %393 = vmatpush.msra.mxu0 %v203
    %394 = vmatpush.msra.mxu0 %v202
    %395 = vmatpush.msra.mxu0 %v201
    %396 = vmatpush.msra.mxu0 %v200
    %397 = vmatpush.msra.mxu0 %v199
    %398 = vmatpush.msra.mxu0 %v198
    %399 = vmatpush.msra.mxu0 %v197
    %400 = vmatpush.msra.mxu0 %v196
    %401 = vmatpush.msra.mxu0 %v195
    %402 = vmatpush.msra.mxu0 %v194
    %403 = vmatpush.msra.mxu0 %v193
    %404 = vmatpush.msra.mxu0 %v192
    %405 = vmatpush.msra.mxu0 %v191
    %406 = vmatmul.f32.gmra.mxu0 %v90
    %v407 = vpop.f32.mrf.mxu0
    %v408 = vadd.f32 %v368, %v407
    %409 = vmatmul.f32.gmra.mxu0 %v97
    %v410 = vpop.f32.mrf.mxu0
    %v411 = vadd.f32 %v371, %v410
    %412 = vmatmul.f32.gmra.mxu0 %v104
    %v413 = vpop.f32.mrf.mxu0
    %v414 = vadd.f32 %v374, %v413
    %415 = vmatmul.f32.gmra.mxu0 %v111
    %v416 = vpop.f32.mrf.mxu0
    %v417 = vadd.f32 %v377, %v416
    %418 = vmatmul.f32.gmra.mxu0 %v118
    %v419 = vpop.f32.mrf.mxu0
    %v420 = vadd.f32 %v380, %v419
    %421 = vmatmul.f32.gmra.mxu0 %v125
    %v422 = vpop.f32.mrf.mxu0
    %v423 = vadd.f32 %v383, %v422
    %424 = vmatmul.f32.gmra.mxu0 %v132
    %v425 = vpop.f32.mrf.mxu0
    %v426 = vadd.f32 %v386, %v425
    %427 = vmatmul.f32.gmra.mxu0 %v139
    %v428 = vpop.f32.mrf.mxu0
    %429 = vdwg.mxu0
    %430 = vmatpush.msra.mxu0 %v222
    %431 = vmatpush.msra.mxu0 %v221
    %432 = vmatpush.msra.mxu0 %v220
    %433 = vmatpush.msra.mxu0 %v219
    %434 = vmatpush.msra.mxu0 %v218
    %435 = vmatpush.msra.mxu0 %v217
    %436 = vmatpush.msra.mxu0 %v216
    %437 = vmatpush.msra.mxu0 %v215
    %438 = vmatpush.msra.mxu0 %v214
    %439 = vmatpush.msra.mxu0 %v213
    %440 = vmatpush.msra.mxu0 %v212
    %441 = vmatpush.msra.mxu0 %v211
    %442 = vmatpush.msra.mxu0 %v210
    %443 = vmatpush.msra.mxu0 %v209
    %444 = vmatpush.msra.mxu0 %v208
    %445 = vmatpush.msra.mxu0 %v207
    %446 = vmatmul.f32.gmra.mxu0 %v91
    %v447 = vpop.f32.mrf.mxu0
    %v448 = vadd.f32 %v408, %v447
    %449 = vmatmul.f32.gmra.mxu0 %v98
    %v450 = vpop.f32.mrf.mxu0
    %v451 = vadd.f32 %v411, %v450
    %452 = vmatmul.f32.gmra.mxu0 %v105
    %v453 = vpop.f32.mrf.mxu0
    %v454 = vadd.f32 %v414, %v453
    %455 = vmatmul.f32.gmra.mxu0 %v112
    %v456 = vpop.f32.mrf.mxu0
    %v457 = vadd.f32 %v417, %v456
    %458 = vmatmul.f32.gmra.mxu0 %v119
    %v459 = vpop.f32.mrf.mxu0
    %v460 = vadd.f32 %v420, %v459
    %461 = vmatmul.f32.gmra.mxu0 %v126
    %v462 = vpop.f32.mrf.mxu0
    %v463 = vadd.f32 %v423, %v462
    %464 = vmatmul.f32.gmra.mxu0 %v133
    %v465 = vpop.f32.mrf.mxu0
    %v466 = vadd.f32 %v426, %v465
    %467 = vmatmul.f32.gmra.mxu0 %v140
    %v468 = vpop.f32.mrf.mxu0
    %469 = vdwg.mxu0
    %470 = vmatpush.msra.mxu0 %v238
    %471 = vmatpush.msra.mxu0 %v237
    %472 = vmatpush.msra.mxu0 %v236
    %473 = vmatpush.msra.mxu0 %v235
    %474 = vmatpush.msra.mxu0 %v234
    %475 = vmatpush.msra.mxu0 %v233
    %476 = vmatpush.msra.mxu0 %v232
    %477 = vmatpush.msra.mxu0 %v231
    %478 = vmatpush.msra.mxu0 %v230
    %479 = vmatpush.msra.mxu0 %v229
    %480 = vmatpush.msra.mxu0 %v228
    %481 = vmatpush.msra.mxu0 %v227
    %482 = vmatpush.msra.mxu0 %v226
    %483 = vmatpush.msra.mxu0 %v225
    %484 = vmatpush.msra.mxu0 %v224
    %485 = vmatpush.msra.mxu0 %v223
    %486 = vmatmul.f32.gmra.mxu0 %v92
    %v487 = vpop.f32.mrf.mxu0
    %v488 = vadd.f32 %v448, %v487
    %489 = vmatmul.f32.gmra.mxu0 %v99
    %v490 = vpop.f32.mrf.mxu0
    %v491 = vadd.f32 %v451, %v490
    %492 = vmatmul.f32.gmra.mxu0 %v106
    %v493 = vpop.f32.mrf.mxu0
    %v494 = vadd.f32 %v454, %v493
    %495 = vmatmul.f32.gmra.mxu0 %v113
    %v496 = vpop.f32.mrf.mxu0
    %v497 = vadd.f32 %v457, %v496
    %498 = vmatmul.f32.gmra.mxu0 %v120
    %v499 = vpop.f32.mrf.mxu0
    %v500 = vadd.f32 %v460, %v499
    %501 = vmatmul.f32.gmra.mxu0 %v127
    %v502 = vpop.f32.mrf.mxu0
    %v503 = vadd.f32 %v463, %v502
    %504 = vmatmul.f32.gmra.mxu0 %v134
    %v505 = vpop.f32.mrf.mxu0
    %v506 = vadd.f32 %v466, %v505
    %507 = vmatmul.f32.gmra.mxu0 %v141
    %v508 = vpop.f32.mrf.mxu0
    %509 = vdwg.mxu0
    %510 = vmatpush.msra.mxu0 0.0
    %511 = vmatpush.msra.mxu0 0.0
    %512 = vmatpush.msra.mxu0 0.0
    %513 = vmatpush.msra.mxu0 0.0
    %514 = vmatpush.msra.mxu0 0.0
    %515 = vmatpush.msra.mxu0 0.0
    %516 = vmatpush.msra.mxu0 0.0
    %517 = vmatpush.msra.mxu0 0.0
    %518 = vmatpush.msra.mxu0 0.0
    %519 = vmatpush.msra.mxu0 0.0
    %520 = vmatpush.msra.mxu0 0.0
    %521 = vmatpush.msra.mxu0 0.0
    %522 = vmatpush.msra.mxu0 0.0
    %523 = vmatpush.msra.mxu0 0.0
    %524 = vmatpush.msra.mxu0 %v240
    %525 = vmatpush.msra.mxu0 %v239
    %526 = vmatmul.f32.gmra.mxu0 %v247
    %v527 = vpop.f32.mrf.mxu0
    %v528 = vadd.f32 %v488, %v527
    %529 = vmatmul.f32.gmra.mxu0 %v250
    %v530 = vpop.f32.mrf.mxu0
    %v531 = vadd.f32 %v491, %v530
    %532 = vmatmul.f32.gmra.mxu0 %v253
    %v533 = vpop.f32.mrf.mxu0
    %v534 = vadd.f32 %v494, %v533
    %535 = vmatmul.f32.gmra.mxu0 %v256
    %v536 = vpop.f32.mrf.mxu0
    %v537 = vadd.f32 %v497, %v536
    %538 = vmatmul.f32.gmra.mxu0 %v259
    %v539 = vpop.f32.mrf.mxu0
    %v540 = vadd.f32 %v500, %v539
    %541 = vmatmul.f32.gmra.mxu0 %v262
    %v542 = vpop.f32.mrf.mxu0
    %v543 = vadd.f32 %v503, %v542
    %544 = vmatmul.f32.gmra.mxu0 %v265
    %v545 = vpop.f32.mrf.mxu0
    %v546 = vadd.f32 %v506, %v545
    %547 = vmatmul.f32.gmra.mxu0 %v268
    %v548 = vpop.f32.mrf.mxu0
    %549 = vdwg.mxu0
    %vm550 = vcmask 818176
    %551 = vst.msk [vmem:[#allocation2] sm:$0xff] %vm550, 0.0
    %v552 = vadd.f32 %v528, 0.0
    %v553 = vsub.f32 %v552, 1.0
    %v554 = vmax.f32 %v553, 0.0
    %vm555 = vcmp.gt.f32.partialorder %v554, 0.0
    %v556 = vsel %vm555, 1, 0
    %v557 = vcvt.s32.f32 %v556
    %v558 = vmul.f32 %v552, 1.5
    %v559 = vmul.f32 %v558, %v557
    %v560 = vsub.f32 %v552, %v559
    %561 = vst.msk [vmem:[#allocation2 + $0x8] sm:$0xff] %vm550, %v554
    %v562 = vmul.f32 %v560, 0.9
    %v563 = vadd.f32 %v531, %v562
    %v564 = vsub.f32 %v563, 1.0
    %v565 = vmax.f32 %v564, 0.0
    %vm566 = vcmp.gt.f32.partialorder %v565, 0.0
    %v567 = vsel %vm566, 1, 0
    %v568 = vcvt.s32.f32 %v567
    %v569 = vmul.f32 %v563, 1.5
    %v570 = vmul.f32 %v569, %v568
    %v571 = vsub.f32 %v563, %v570
    %572 = vst.msk [vmem:[#allocation2 + $0x10] sm:$0xff] %vm550, %v565
    %v573 = vmul.f32 %v571, 0.9
    %v574 = vadd.f32 %v534, %v573
    %v575 = vsub.f32 %v574, 1.0
    %v576 = vmax.f32 %v575, 0.0
    %vm577 = vcmp.gt.f32.partialorder %v576, 0.0
    %v578 = vsel %vm577, 1, 0
    %v579 = vcvt.s32.f32 %v578
    %v580 = vmul.f32 %v574, 1.5
    %v581 = vmul.f32 %v580, %v579
    %v582 = vsub.f32 %v574, %v581
    %583 = vst.msk [vmem:[#allocation2 + $0x18] sm:$0xff] %vm550, %v576
    %v584 = vmul.f32 %v582, 0.9
    %v585 = vadd.f32 %v537, %v584
    %v586 = vsub.f32 %v585, 1.0
    %v587 = vmax.f32 %v586, 0.0
    %vm588 = vcmp.gt.f32.partialorder %v587, 0.0
    %v589 = vsel %vm588, 1, 0
    %v590 = vcvt.s32.f32 %v589
    %v591 = vmul.f32 %v585, 1.5
    %v592 = vmul.f32 %v591, %v590
    %v593 = vsub.f32 %v585, %v592
    %594 = vst.msk [vmem:[#allocation2 + $0x20] sm:$0xff] %vm550, %v587
    %v595 = vmul.f32 %v593, 0.9
    %v596 = vadd.f32 %v540, %v595
    %v597 = vsub.f32 %v596, 1.0
    %v598 = vmax.f32 %v597, 0.0
    %vm599 = vcmp.gt.f32.partialorder %v598, 0.0
    %v600 = vsel %vm599, 1, 0
    %v601 = vcvt.s32.f32 %v600
    %v602 = vmul.f32 %v596, 1.5
    %v603 = vmul.f32 %v602, %v601
    %v604 = vsub.f32 %v596, %v603
    %605 = vst.msk [vmem:[#allocation2 + $0x28] sm:$0xff] %vm550, %v598
    %v606 = vmul.f32 %v604, 0.9
    %v607 = vadd.f32 %v543, %v606
    %v608 = vsub.f32 %v607, 1.0
    %v609 = vmax.f32 %v608, 0.0
    %vm610 = vcmp.gt.f32.partialorder %v609, 0.0
    %v611 = vsel %vm610, 1, 0
    %v612 = vcvt.s32.f32 %v611
    %v613 = vmul.f32 %v607, 1.5
    %v614 = vmul.f32 %v613, %v612
    %v615 = vsub.f32 %v607, %v614
    %616 = vst.msk [vmem:[#allocation2 + $0x30] sm:$0xff] %vm550, %v609
    %v617 = vmul.f32 %v615, 0.9
    %v618 = vadd.f32 %v546, %v617
    %v619 = vsub.f32 %v618, 1.0
    %v620 = vmax.f32 %v619, 0.0
    %621 = vst.msk [vmem:[#allocation2 + $0x38] sm:$0xff] %vm550, %v620
    %v622 = vld [vmem:[#allocation2] sm:$0xff]
    %v623 = vld [vmem:[#allocation2 + $0x8] sm:$0xff]
    %v624 = vld [vmem:[#allocation2 + $0x10] sm:$0xff]
    %v625 = vld [vmem:[#allocation2 + $0x18] sm:$0xff]
    %v626 = vld [vmem:[#allocation2 + $0x20] sm:$0xff]
    %v627 = vld [vmem:[#allocation2 + $0x28] sm:$0xff]
    %v628 = vld [vmem:[#allocation2 + $0x30] sm:$0xff]
    %v629 = vld [vmem:[#allocation2 + $0x38] sm:$0xff]
    %v630 = vld [vmem:[%s4] sm:$0xff]
    %v631 = vld [vmem:[%s4 + $0x8] sm:$0xff]
    %v632 = vld [vmem:[%s4 + $0x10] sm:$0xff]
    %v633 = vld [vmem:[%s4 + $0x18] sm:$0xff]
    %v634 = vld [vmem:[%s4 + $0x20] sm:$0xff]
    %v635 = vld [vmem:[%s4 + $0x28] sm:$0xff]
    %v636 = vld [vmem:[%s4 + $0x30] sm:$0xff]
    %v637 = vld [vmem:[%s4 + $0x38] sm:$0xff]
    %v638 = vld [vmem:[%s4 + $0x40] sm:$0xff]
    %v639 = vld [vmem:[%s4 + $0x48] sm:$0xff]
    %v640 = vld [vmem:[%s4 + $0x50] sm:$0xff]
    %v641 = vld [vmem:[%s4 + $0x58] sm:$0xff]
    %v642 = vld [vmem:[%s4 + $0x60] sm:$0xf]
    %v643 = vld [vmem:[%s5] sm:$0x1]
    %v645 = vperm.slane %v643, 0
    %v648 = vsel %vm550, %v622, 0
    %v651 = vsel %vm550, %v623, 0
    %v654 = vsel %vm550, %v624, 0
    %v657 = vsel %vm550, %v625, 0
    %v660 = vsel %vm550, %v626, 0
    %v663 = vsel %vm550, %v627, 0
    %v666 = vsel %vm550, %v628, 0
    %v669 = vsel %vm550, %v629, 0
    %vm671 = vcmask 1043456
    %v673 = vsel %vm671, %v642, 0
    %675 = vmatpush.msra.mxu0 0.0
    %676 = vmatpush.msra.mxu0 0.0
    %677 = vmatpush.msra.mxu0 0.0
    %678 = vmatpush.msra.mxu0 %v673
    %679 = vmatpush.msra.mxu0 %v641
    %680 = vmatpush.msra.mxu0 %v640
    %681 = vmatpush.msra.mxu0 %v639
    %682 = vmatpush.msra.mxu0 %v638
    %683 = vmatpush.msra.mxu0 %v637
    %684 = vmatpush.msra.mxu0 %v636
    %685 = vmatpush.msra.mxu0 %v635
    %686 = vmatpush.msra.mxu0 %v634
    %687 = vmatpush.msra.mxu0 %v633
    %688 = vmatpush.msra.mxu0 %v632
    %689 = vmatpush.msra.mxu0 %v631
    %690 = vmatpush.msra.mxu0 %v630
    %691 = vmatmul.f32.gmra.mxu0 %v648
    %v692 = vpop.f32.mrf.mxu0
    %v693 = vadd.f32 %v645, %v692
    %694 = vmatmul.f32.gmra.mxu0 %v651
    %v695 = vpop.f32.mrf.mxu0
    %v696 = vadd.f32 %v645, %v695
    %697 = vmatmul.f32.gmra.mxu0 %v654
    %v698 = vpop.f32.mrf.mxu0
    %v699 = vadd.f32 %v645, %v698
    %700 = vmatmul.f32.gmra.mxu0 %v657
    %v701 = vpop.f32.mrf.mxu0
    %v702 = vadd.f32 %v645, %v701
    %703 = vmatmul.f32.gmra.mxu0 %v660
    %v704 = vpop.f32.mrf.mxu0
    %v705 = vadd.f32 %v645, %v704
    %706 = vmatmul.f32.gmra.mxu0 %v663
    %v707 = vpop.f32.mrf.mxu0
    %v708 = vadd.f32 %v645, %v707
    %709 = vmatmul.f32.gmra.mxu0 %v666
    %v710 = vpop.f32.mrf.mxu0
    %v711 = vadd.f32 %v645, %v710
    %712 = vmatmul.f32.gmra.mxu0 %v669
    %v713 = vpop.f32.mrf.mxu0
    %714 = vdwg.mxu0
    %v715 = vadd.f32 %v693, 0.0
    %v716 = vsub.f32 %v715, 1.0
    %v717 = vmax.f32 %v716, 0.0
    %vm718 = vcmp.gt.f32.partialorder %v717, 0.0
    %v719 = vsel %vm718, 1, 0
    %v720 = vcvt.s32.f32 %v719
    %v721 = vmul.f32 %v715, 1.5
    %v722 = vmul.f32 %v721, %v720
    %v723 = vsub.f32 %v715, %v722
    %v724 = vmul.f32 %v723, 0.9
    %v725 = vadd.f32 %v696, %v724
    %v726 = vsub.f32 %v725, 1.0
    %v727 = vmax.f32 %v726, 0.0
    %vm728 = vcmp.gt.f32.partialorder %v727, 0.0
    %v729 = vsel %vm728, 1, 0
    %v730 = vcvt.s32.f32 %v729
    %v731 = vmul.f32 %v725, 1.5
    %v732 = vmul.f32 %v731, %v730
    %v733 = vsub.f32 %v725, %v732
    %v734 = vadd.f32 %v733, 0.0
    %v735 = vmul.f32 %v733, 0.9
    %v736 = vadd.f32 %v699, %v735
    %v737 = vsub.f32 %v736, 1.0
    %v738 = vmax.f32 %v737, 0.0
    %vm739 = vcmp.gt.f32.partialorder %v738, 0.0
    %v740 = vsel %vm739, 1, 0
    %v741 = vcvt.s32.f32 %v740
    %v742 = vmul.f32 %v736, 1.5
    %v743 = vmul.f32 %v742, %v741
    %v744 = vsub.f32 %v736, %v743
    %v745 = vadd.f32 %v734, %v744
    %v746 = vmul.f32 %v744, 0.9
    %v747 = vadd.f32 %v702, %v746
    %v748 = vsub.f32 %v747, 1.0
    %v749 = vmax.f32 %v748, 0.0
    %vm750 = vcmp.gt.f32.partialorder %v749, 0.0
    %v751 = vsel %vm750, 1, 0
    %v752 = vcvt.s32.f32 %v751
    %v753 = vmul.f32 %v747, 1.5
    %v754 = vmul.f32 %v753, %v752
    %v755 = vsub.f32 %v747, %v754
    %v756 = vadd.f32 %v745, %v755
    %v757 = vmul.f32 %v755, 0.9
    %v758 = vadd.f32 %v705, %v757
    %v759 = vsub.f32 %v758, 1.0
    %v760 = vmax.f32 %v759, 0.0
    %vm761 = vcmp.gt.f32.partialorder %v760, 0.0
    %v762 = vsel %vm761, 1, 0
    %v763 = vcvt.s32.f32 %v762
    %v764 = vmul.f32 %v758, 1.5
    %v765 = vmul.f32 %v764, %v763
    %v766 = vsub.f32 %v758, %v765
    %v767 = vadd.f32 %v756, %v766
    %v768 = vmul.f32 %v766, 0.9
    %v769 = vadd.f32 %v708, %v768
    %v770 = vsub.f32 %v769, 1.0
    %v771 = vmax.f32 %v770, 0.0
    %vm772 = vcmp.gt.f32.partialorder %v771, 0.0
    %v773 = vsel %vm772, 1, 0
    %v774 = vcvt.s32.f32 %v773
    %v775 = vmul.f32 %v769, 1.5
    %v776 = vmul.f32 %v775, %v774
    %v777 = vsub.f32 %v769, %v776
    %v778 = vadd.f32 %v767, %v777
    %v779 = vmul.f32 %v777, 0.9
    %v780 = vadd.f32 %v711, %v779
    %v781 = vsub.f32 %v780, 1.0
    %v782 = vmax.f32 %v781, 0.0
    %vm783 = vcmp.gt.f32.partialorder %v782, 0.0
    %v784 = vsel %vm783, 1, 0
    %v785 = vcvt.s32.f32 %v784
    %v786 = vmul.f32 %v780, 1.5
    %v787 = vmul.f32 %v786, %v785
    %v788 = vsub.f32 %v780, %v787
    %v789 = vadd.f32 %v778, %v788
    %v790 = vmul.f32 %v789, 0.16666667
    %vm791 = vcmask 80896
    %v792 = vsel %vm791, %v790, -inf
    %793 = vmax.xlane.f32.xlu0 %v792
    %v794 = vpop.xlane.xlu0 %793
    %v795 = vsub.f32 %v790, %v794
    %v796 = vmul.f32 %v795, 1.442695
    %v797 = vpow.pop %v796
    %v798 = vsel %vm791, %v797, 0.0
    %799 = vadd.xlane.f32.xlu0 %v798
    %v800 = vpop.xlane.xlu0 %799
    %v801 = vlog2.pop %v800
    %v802 = vmul.f32 %v801, 0.6931472
    %v803 = vsub.f32 %v795, %v802
    %804 = vst.msk [vmem:[#allocation3] sm:$0xff] %vm791, %v803
    // Predicated region
    $region26: #{tpu_custom_call.1} parent=1 // pred_check
      _
    $region27: #{tpu_custom_call.1} parent=1 // pred_check_branch
      %806 = sbr.rel (0) target = $region29
    $region28: #{tpu_custom_call.1} parent=1 // pred_region
      %808 = vsyncadd [#allocation4], 0
      %s810 = sshll.u32 [#allocation3], 4
      %s811 = int_to_ptr.vmem [resolvable:$true] %s810
      %s812 = sshll.u32 %s6, 4
      %s813 = int_to_ptr.hbm [resolvable:$true] %s812
      %815 = dma.vmem_to_hbm [thread:$0]  %s811, 128, %s813, [#allocation4]
    $region29: #{tpu_custom_call.1} parent=1 // pred_fallthru
      _
    // Predicated region
    $region30: #{tpu_custom_call.1} parent=1 // pred_check
      _
    $region31: #{tpu_custom_call.1} parent=1 // pred_check_branch
      %817 = sbr.rel (0) target = $region33
    $region32: #{tpu_custom_call.1} parent=1 // pred_region
      %819 = dma.done [#allocation4], 128
    $region33: #{tpu_custom_call.1} parent=1 // pred_fallthru
      _
    %820 = vsyncpa [#allocation4], 1

</llo_original>
